<compile_context>
chip_gen: v7x
topology: tpu7x:2x2x1
jax: 0.10.0
libtpu: 0.0.40
codegen_flags: <defaults>
</compile_context>

<pallas_src>
import functools

import jax
import jax.numpy as jnp
import numpy as np
from jax.experimental import pallas as pl
from jax.experimental.pallas import tpu as pltpu


# ---------------------------------------------------------------- degree utils
def _degrees(L):
    lmin, lmax = L
    return list(range(lmin, lmax + 1))


def _num_orders(L):
    lmin, lmax = L
    return (lmax + 1) ** 2 - lmin ** 2


def _order_to_degree_index(L):
    """For each order m, the 0-based index of its degree within the range."""
    idx = []
    for i, l in enumerate(_degrees(L)):
        idx.extend([i] * (2 * l + 1))
    return np.asarray(idx, dtype=np.int32)


# --------------------------------------------------------- hardware parameters
@functools.lru_cache(maxsize=1)
def _tpu_params():
    """(vmem_capacity_bytes, tensorcores sharing one Pallas grid, has bf16 VALU)."""
    vmem_cap = 64 * 1024 * 1024           # conservative default (v7x per-core VMEM)
    try:
        vmem_cap = int(pltpu.get_tpu_info().vmem_capacity_bytes)
    except Exception:
        pass
    kind = ""
    try:
        kind = jax.devices()[0].device_kind.lower()
    except Exception:
        pass
    two_tc = ("v4" in kind) or ("v7" in kind) or ("7x" in kind)   # megacore-style
    bf16_valu = ("v6" in kind) or ("v7" in kind) or ("7x" in kind)
    return vmem_cap, (2 if two_tc else 1), bf16_valu


# ------------------------------------------------------------------- constants
@functools.lru_cache(maxsize=None)
def _norm_constants(L, C, degree_scale, degree_wise):
    """MXU reduce/scatter matrices with the per-order coefficients folded in.

    reduce_mat : (M*C, GP) f32, reduce_mat[j, g] = coef_j * [group(j) == g]
    scatter_mat: (GP, M*C) f32, scatter_mat[g, j] = [group(j) == g]
    """
    degs = _degrees(L)
    n_deg = len(degs)
    deg_idx = _order_to_degree_index(L)                        # (M,)
    if degree_scale:
        scale = np.asarray([2 * l + 1 for l in degs], np.float32)
    else:
        scale = np.ones((n_deg,), np.float32)
    coef = 1.0 / (C * scale[deg_idx])                          # (M,)
    if degree_wise:
        group = deg_idx
        n_groups = n_deg
    else:
        coef = coef / n_deg                                    # the 1/|L| factor
        group = np.zeros_like(deg_idx)
        n_groups = 1
    coef_mc = np.repeat(coef.astype(np.float32), C)            # (MC,)
    group_mc = np.repeat(group, C)                             # (MC,)
    mc = coef_mc.shape[0]
    gp = max(128, ((n_groups + 127) // 128) * 128)             # MXU-friendly lane pad
    reduce_mat = np.zeros((mc, gp), np.float32)
    reduce_mat[np.arange(mc), group_mc] = coef_mc
    scatter_mat = np.zeros((gp, mc), np.float32)
    scatter_mat[group_mc, np.arange(mc)] = 1.0
    # Cache the *device* arrays so repeated calls do not re-upload them.
    return jnp.asarray(reduce_mat), jnp.asarray(scatter_mat)


# ------------------------------------------------------------------ the kernel
def _make_kernel(has_weight, eps, bf16_epilogue):
    """Kernel over a (TB, M*C) lane-dense block. Refs (in order):
       x, reduce_mat, scatter_mat, [w if has_weight], out."""

    def kernel(*refs):
        it = iter(refs)
        x_ref = next(it)            # (TB, MC), I/O dtype
        red_ref = next(it)          # (MC, GP) f32, coefficients folded in
        sct_ref = next(it)          # (GP, MC) f32, 0/1 degree->order scatter
        w_ref = next(it) if has_weight else None
        o_ref = next(it)            # (TB, MC), I/O dtype

        x = x_ref[...]
        xf = x.astype(jnp.float32)
        # Per-degree (or global) mean-square statistics on the MXU. The
        # 1/(C*scale_l) (and 1/|L|) factors live in red_ref, so no extra
        # full-width VPU multiply is needed.
        s = jnp.dot(xf * xf, red_ref[...], preferred_element_type=jnp.float32)
        inv = jax.lax.rsqrt(s + eps)                               # (TB, GP), EUP
        inv_full = jnp.dot(inv, sct_ref[...],
                           preferred_element_type=jnp.float32)     # (TB, MC), MXU

        if bf16_epilogue:
            # bf16 VALU (v6e / v7x): packed epilogue halves the VPU work of the
            # normalize/affine multiplies; statistics above stay in f32.
            y = x * inv_full.astype(x.dtype)
            if has_weight:
                y = y * w_ref[...]
        else:
            y = xf * inv_full
            if has_weight:
                y = y * w_ref[...]
        o_ref[...] = y.astype(o_ref.dtype)

    return kernel


# --------------------------------------------------------------- tile sizing
def _choose_tiling(n_rows, mc, io_itemsize, vmem_cap, num_tc):
    """Pick the batch tile TB and the number of grid steps (bytes based)."""
    # Live VMEM per grid step ~= 2x double-buffered (in + out) I/O blocks plus
    # ~4 f32-sized temporaries (x_f32 / x^2, matmul results, y) from the
    # in-kernel upcast -> bf16 I/O is correctly charged ~2x its block bytes.
    budget = (vmem_cap * 3) // 8          # ~48 MiB on 128-MiB parts, ~24 MiB on v7x
    bytes_per_row = mc * (4 * io_itemsize + 4 * 4)
    tb = max((budget // bytes_per_row) // 16 * 16, 16)   # sublane-friendly

    if tb >= n_rows:
        # Whole problem fits in one block; split only if a second TensorCore
        # would otherwise idle (v4/v7x). Single-TC chips keep one grid step.
        if num_tc > 1 and n_rows >= 16 * num_tc:
            tb = ((pl.cdiv(n_rows, num_tc) + 15) // 16) * 16
            if tb < n_rows:
                return tb, pl.cdiv(n_rows, tb)
        return n_rows, 1

    steps = pl.cdiv(n_rows, tb)
    if num_tc > 1 and steps > 1 and steps % num_tc:
        # Keep the grid-step count a multiple of the TensorCore count so the
        # "parallel" grid axis splits ~evenly (avoids a tiny-tail imbalance).
        steps = pl.cdiv(steps, num_tc) * num_tc
        tb = ((pl.cdiv(n_rows, steps) + 15) // 16) * 16
        steps = pl.cdiv(n_rows, tb)
    return tb, steps


# ------------------------------------------------------------------- wrapper
def equivariant_layer_norm(x, L, weight=None, *, degree_scale=True,
                           degree_wise=False, eps=1e-5):
    """Pallas TPU implementation of EquivariantLayerNorm.forward.

    x      : (..., num_orders, C) array (f32 or bf16).
    weight : None, or (1, C) if not degree_wise, or (num_degrees, C) if degree_wise.
    """
    L = (int(L[0]), int(L[1]))
    orig_shape = x.shape
    M = _num_orders(L)
    assert orig_shape[-2] == M, "num_orders of x does not match degree range L"
    C = int(orig_shape[-1])
    MC = M * C

    # Lane-dense flatten (free, row-major). MC need not be a multiple of 128;
    # the last lane tile of a block is partially masked (~few % of stores) but
    # padding the channel axis would cost an extra HBM pass, so we don't.
    x2 = x.reshape(-1, MC)
    n_rows = x2.shape[0]
    io_itemsize = int(jnp.dtype(x2.dtype).itemsize)

    vmem_cap, num_tc, bf16_valu = _tpu_params()
    bf16_epilogue = bool(bf16_valu and x2.dtype == jnp.bfloat16)

    TB, n_steps = _choose_tiling(n_rows, MC, io_itemsize, vmem_cap, num_tc)
    grid = (n_steps,)

    reduce_mat, scatter_mat = _norm_constants(L, C, bool(degree_scale),
                                              bool(degree_wise))
    GP = reduce_mat.shape[1]

    operands = [x2, reduce_mat, scatter_mat]
    in_specs = [
        pl.BlockSpec((TB, MC), lambda n: (n, 0)),     # streamed rows
        pl.BlockSpec((MC, GP), lambda n: (0, 0)),     # constants: DMA'd once
        pl.BlockSpec((GP, MC), lambda n: (0, 0)),
    ]

    has_weight = weight is not None
    if has_weight:
        deg_idx = _order_to_degree_index(L)
        w = jnp.asarray(weight, jnp.float32)
        if degree_wise:
            w_full = w[jnp.asarray(deg_idx), :]                       # (M, C)
        else:
            w_full = jnp.broadcast_to(w.reshape(1, C), (M, C))
        w_dtype = x2.dtype if bf16_epilogue else jnp.float32
        w_flat = w_full.reshape(1, MC).astype(w_dtype)                # tiny
        operands.append(w_flat)
        in_specs.append(pl.BlockSpec((1, MC), lambda n: (0, 0)))

    kernel = _make_kernel(has_weight, float(eps), bf16_epilogue)

    const_bytes = (reduce_mat.size + scatter_mat.size) * 4 + (MC * 4 if has_weight else 0)
    cost = pl.CostEstimate(
        flops=int(n_rows * (4 * MC * GP + 4 * MC)),
        transcendentals=int(n_rows * GP),
        bytes_accessed=int(2 * n_rows * MC * io_itemsize + const_bytes),
    )

    # NOTE: the last grid block may extend past n_rows; those rows contain
    # whatever was in the buffer (their rsqrt may be Inf/NaN), but every row is
    # fully independent and out-of-range stores are dropped, so this is
    # harmless. Do not add cross-row reductions without masking the tail.
    out = pl.pallas_call(
        kernel,
        out_shape=jax.ShapeDtypeStruct((n_rows, MC), x2.dtype),
        grid_spec=pltpu.PrefetchScalarGridSpec(
            num_scalar_prefetch=0,
            grid=grid,
            in_specs=in_specs,
            out_specs=pl.BlockSpec((TB, MC), lambda n: (n, 0)),
        ),
        compiler_params=pltpu.CompilerParams(
            dimension_semantics=("parallel",),
            vmem_limit_bytes=int(vmem_cap // 2),   # generation-aware headroom
        ),
        cost_estimate=cost,
    )(*operands)

    return out.reshape(orig_shape)


# --------------------------------------------------------- pure-JAX reference
def _reference(x, L, weight, degree_scale, degree_wise, eps):
    degs = _degrees(L)
    deg_idx = _order_to_degree_index(L)
    N, M, C = x.shape
    xf = x.astype(jnp.float32)
    scale = (np.asarray([2 * l + 1 for l in degs], np.float32)
             if degree_scale else np.ones((len(degs),), np.float32))
    xsq = xf ** 2
    per_deg, off = [], 0
    for i, l in enumerate(degs):
        nl = 2 * l + 1
        per_deg.append(jnp.sum(xsq[:, off:off + nl, :], axis=(1, 2)) / (C * scale[i]))
        off += nl
    per_deg = jnp.stack(per_deg, axis=1)                     # (N, n_deg)
    if degree_wise:
        sigma2 = per_deg + eps                               # (N, n_deg)
        inv = jax.lax.rsqrt(sigma2)[:, deg_idx][:, :, None]  # (N, M, 1)
        out = xf * inv
        if weight is not None:
            out = out * jnp.asarray(weight, jnp.float32)[deg_idx][None]
    else:
        sigma2 = jnp.mean(per_deg, axis=1, keepdims=True) + eps   # (N, 1)
        out = xf * jax.lax.rsqrt(sigma2)[:, :, None]
        if weight is not None:
            out = out * jnp.asarray(weight, jnp.float32).reshape(1, 1, C)
    return out


# --------------------------------------------------------------------- driver
if __name__ == "__main__":
    key = jax.random.PRNGKey(0)
    N, C = 64, 16
    L = (1, 3)                       # degrees 1..3 -> num_orders = 3+5+7 = 15
    M = _num_orders(L)
    n_deg = L[1] - L[0] + 1

    kx, kw1, kw2 = jax.random.split(key, 3)
    x = jax.random.normal(kx, (N, M, C), jnp.float32)

    # f32 tolerance: the per-degree sums / scatter ride the MXU, whose f32
    # matmuls are done in multiple reduced-precision passes on some
    # generations; 2e-3 covers that while still catching any real bug
    # (a wrong scale / missing 1/|L| factor is tens of percent off).
    TOL = 2e-3

    # Config 1: module defaults (degree_scale=True, degree_wise=False) with a
    # non-trivial (1, C) affine weight.
    w1 = 1.0 + 0.1 * jax.random.normal(kw1, (1, C), jnp.float32)
    y1 = equivariant_layer_norm(x, L, w1, degree_scale=True,
                                degree_wise=False, eps=1e-5)
    jax.block_until_ready(y1)
    r1 = _reference(x, L, w1, True, False, 1e-5)
    assert y1.shape == x.shape and y1.dtype == x.dtype
    assert jnp.allclose(y1, r1, atol=TOL, rtol=TOL), "degree_wise=False mismatch"

    # Config 2: degree_wise=True with a (num_degrees, C) affine weight.
    w2 = 1.0 + 0.1 * jax.random.normal(kw2, (n_deg, C), jnp.float32)
    y2 = equivariant_layer_norm(x, L, w2, degree_scale=True,
                                degree_wise=True, eps=1e-5)
    jax.block_until_ready(y2)
    r2 = _reference(x, L, w2, True, True, 1e-5)
    assert jnp.allclose(y2, r2, atol=TOL, rtol=TOL), "degree_wise=True mismatch"

    # Config 3: bf16 I/O, no affine weight, degree_scale=False, degree_wise=True.
    xb = x.astype(jnp.bfloat16)
    y3 = equivariant_layer_norm(xb, L, None, degree_scale=False,
                                degree_wise=True, eps=1e-5)
    jax.block_until_ready(y3)
    assert y3.dtype == jnp.bfloat16 and y3.shape == xb.shape
    r3 = _reference(xb.astype(jnp.float32), L, None, False, True, 1e-5)
    assert jnp.allclose(y3.astype(jnp.float32), r3, atol=3e-2, rtol=3e-2), \
        "bf16 / no-weight mismatch"

    print("KERNEL_OK")
</pallas_src>

<mosaic_0001>
module attributes {stable_mosaic.version = 11 : i64} {
  func.func @kernel(%arg0: i32, %arg1: memref<64x240xf32, #tpu.memory_space<vmem>>, %arg2: memref<240x128xf32, #tpu.memory_space<vmem>>, %arg3: memref<128x240xf32, #tpu.memory_space<vmem>>, %arg4: memref<1x240xf32, #tpu.memory_space<vmem>>, %arg5: memref<64x240xf32, #tpu.memory_space<vmem>>) attributes {dimension_semantics = [#tpu.dimension_semantics<parallel>], iteration_bounds = array<i64: 1>, scalar_prefetch = 0 : i64, scratch_operands = 0 : i64, tpu.core_type = #tpu.core_type<tc>, window_params = [{transform_indices = @transform_0, window_bounds = array<i64: 64, 240>}, {pipeline_mode = #tpu.pipeline_mode<synchronous>, transform_indices = @transform_1, window_bounds = array<i64: 240, 128>}, {pipeline_mode = #tpu.pipeline_mode<synchronous>, transform_indices = @transform_2, window_bounds = array<i64: 128, 240>}, {pipeline_mode = #tpu.pipeline_mode<synchronous>, transform_indices = @transform_3, window_bounds = array<i64: 1, 240>}, {transform_indices = @transform_4, window_bounds = array<i64: 64, 240>}]} {
    %c0 = arith.constant 0 : index
    %c0_0 = arith.constant 0 : index
    %0 = vector.load %arg1[%c0, %c0_0] : memref<64x240xf32, #tpu.memory_space<vmem>>, vector<64x240xf32>
    %1 = arith.mulf %0, %0 : vector<64x240xf32>
    %c0_1 = arith.constant 0 : index
    %c0_2 = arith.constant 0 : index
    %2 = vector.load %arg2[%c0_1, %c0_2] : memref<240x128xf32, #tpu.memory_space<vmem>>, vector<240x128xf32>
    %cst = arith.constant dense<0.000000e+00> : vector<64x128xf32>
    %3 = tpu.matmul %1, %2, %cst {dimension_numbers = #tpu.dot_dimension_numbers<[1], [0], [0], [1], [0, 0, 1, 1], [], []>} : vector<64x240xf32>, vector<240x128xf32>, vector<64x128xf32> -> vector<64x128xf32>
    %cst_3 = arith.constant 9.99999974E-6 : f32
    %4 = vector.broadcast %cst_3 : f32 to vector<64x128xf32>
    %5 = arith.addf %3, %4 : vector<64x128xf32>
    %6 = math.rsqrt %5 : vector<64x128xf32>
    %c0_4 = arith.constant 0 : index
    %c0_5 = arith.constant 0 : index
    %7 = vector.load %arg3[%c0_4, %c0_5] : memref<128x240xf32, #tpu.memory_space<vmem>>, vector<128x240xf32>
    %cst_6 = arith.constant dense<0.000000e+00> : vector<64x240xf32>
    %8 = tpu.matmul %6, %7, %cst_6 {dimension_numbers = #tpu.dot_dimension_numbers<[1], [0], [0], [1], [0, 0, 1, 1], [], []>} : vector<64x128xf32>, vector<128x240xf32>, vector<64x240xf32> -> vector<64x240xf32>
    %9 = arith.mulf %0, %8 : vector<64x240xf32>
    %c0_7 = arith.constant 0 : index
    %c0_8 = arith.constant 0 : index
    %10 = vector.load %arg4[%c0_7, %c0_8] : memref<1x240xf32, #tpu.memory_space<vmem>>, vector<1x240xf32>
    %11 = vector.broadcast %10 : vector<1x240xf32> to vector<64x240xf32>
    %12 = arith.mulf %9, %11 : vector<64x240xf32>
    %c0_9 = arith.constant 0 : index
    %c0_10 = arith.constant 0 : index
    %13 = vector.load %arg5[%c0_9, %c0_10] : memref<64x240xf32, #tpu.memory_space<vmem>>, vector<64x240xf32>
    tpu.vector_store %arg5[%c0_9, %c0_10], %12 {strides = array<i32>} : memref<64x240xf32, #tpu.memory_space<vmem>>, vector<64x240xf32>,
    return
  }
  func.func @transform_0(%arg0: i32) -> (i32, i32) {
    %c0_i32 = arith.constant 0 : i32
    %c0_i32_0 = arith.constant 0 : i32
    return %arg0, %c0_i32 : i32, i32
  }
  func.func @transform_1(%arg0: i32) -> (i32, i32) {
    %c0_i32 = arith.constant 0 : i32
    %c0_i32_0 = arith.constant 0 : i32
    %c0_i32_1 = arith.constant 0 : i32
    return %c0_i32, %c0_i32_0 : i32, i32
  }
  func.func @transform_2(%arg0: i32) -> (i32, i32) {
    %c0_i32 = arith.constant 0 : i32
    %c0_i32_0 = arith.constant 0 : i32
    %c0_i32_1 = arith.constant 0 : i32
    return %c0_i32, %c0_i32_0 : i32, i32
  }
  func.func @transform_3(%arg0: i32) -> (i32, i32) {
    %c0_i32 = arith.constant 0 : i32
    %c0_i32_0 = arith.constant 0 : i32
    %c0_i32_1 = arith.constant 0 : i32
    return %c0_i32, %c0_i32_0 : i32, i32
  }
  func.func @transform_4(%arg0: i32) -> (i32, i32) {
    %c0_i32 = arith.constant 0 : i32
    %c0_i32_0 = arith.constant 0 : i32
    return %arg0, %c0_i32 : i32, i32
  }
}

</mosaic_0001>

<llo_original>
// kernel: tpu_custom_call.1
$region0: #{tpu_custom_call.1}
  #allocation0 [shape = 'u32[]', space=smem, size = 0x4, offset = 0x4, fixed_abs, tag = 'smem constant byte address 0x4 - core index']
  #allocation1 [shape = 'u32[144,128]{1,0:T(1,128)}', space=vmem, size = 0x12000, scoped, tag = 'internal scratch']
  %s0 = inlined_call_operand.vmem [shape: f32[64,240], index: 0, kind: input, shape index: {}]
  %s1 = inlined_call_operand.vmem [shape: f32[240,128], index: 1, kind: input, shape index: {}]
  %s2 = inlined_call_operand.vmem [shape: f32[128,240], index: 2, kind: input, shape index: {}]
  %s3 = inlined_call_operand.vmem [shape: f32[1,240], index: 3, kind: input, shape index: {}]
  %s4 = inlined_call_operand.hbm [shape: f32[64,240], index: 4, kind: output, shape index: {}]
  %s5 = sld [smem:[#allocation0]]
  $region26: #{tpu_custom_call.1} parent=0
    _
  %s7 = ssub.s32 1, %s5
  %s8 = scalar_select 0, %s7, %s5
  $region1: #{tpu_custom_call.1} parent=0
    #allocation2 [shape = 'u8[65536]{0}', space=vmem, size = 0x10000, scoped, tag = 'output window, operand 0, single buffered']
    #allocation3 [shape = 's32[1]{0}', space=sflag, size = 0x4, scoped, tag = 'scoped memory for tpu_custom_call.1']
    %9 = vsyncpa [#allocation3], 0
    // Predicated region
    $region2: #{tpu_custom_call.1} parent=1 // pred_check
      _
    $region3: #{tpu_custom_call.1} parent=1 // pred_check_branch
      %11 = sbr.rel (0) target = $region5
    $region4: #{tpu_custom_call.1} parent=1 // pred_region
      _
    $region5: #{tpu_custom_call.1} parent=1 // pred_fallthru
      _
    // Predicated region
    $region6: #{tpu_custom_call.1} parent=1 // pred_check
      _
    $region7: #{tpu_custom_call.1} parent=1 // pred_check_branch
      %13 = sbr.rel (0) target = $region9
    $region8: #{tpu_custom_call.1} parent=1 // pred_region
      _
    $region9: #{tpu_custom_call.1} parent=1 // pred_fallthru
      _
    // Predicated region
    $region10: #{tpu_custom_call.1} parent=1 // pred_check
      _
    $region11: #{tpu_custom_call.1} parent=1 // pred_check_branch
      %15 = sbr.rel (0) target = $region13
    $region12: #{tpu_custom_call.1} parent=1 // pred_region
      _
    $region13: #{tpu_custom_call.1} parent=1 // pred_fallthru
      _
    // Predicated region
    $region14: #{tpu_custom_call.1} parent=1 // pred_check
      _
    $region15: #{tpu_custom_call.1} parent=1 // pred_check_branch
      %17 = sbr.rel (0) target = $region17
    $region16: #{tpu_custom_call.1} parent=1 // pred_region
      _
    $region17: #{tpu_custom_call.1} parent=1 // pred_fallthru
      _
    %v18 = vld [vmem:[%s0] sm:$0xff]
    %v19 = vld [vmem:[%s0 + $0x8] sm:$0xff]
    %v20 = vld [vmem:[%s0 + $0x10] sm:$0xff]
    %v21 = vld [vmem:[%s0 + $0x18] sm:$0xff]
    %v22 = vld [vmem:[%s0 + $0x20] sm:$0xff]
    %v23 = vld [vmem:[%s0 + $0x28] sm:$0xff]
    %v24 = vld [vmem:[%s0 + $0x30] sm:$0xff]
    %v25 = vld [vmem:[%s0 + $0x38] sm:$0xff]
    %v26 = vld [vmem:[%s0 + $0x40] sm:$0xff]
    %v27 = vld [vmem:[%s0 + $0x48] sm:$0xff]
    %v28 = vld [vmem:[%s0 + $0x50] sm:$0xff]
    %v29 = vld [vmem:[%s0 + $0x58] sm:$0xff]
    %v30 = vld [vmem:[%s0 + $0x60] sm:$0xff]
    %v31 = vld [vmem:[%s0 + $0x68] sm:$0xff]
    %v32 = vld [vmem:[%s0 + $0x70] sm:$0xff]
    %v33 = vld [vmem:[%s0 + $0x78] sm:$0xff]
    %v34 = vmul.f32 %v18, %v18
    %v35 = vmul.f32 %v19, %v19
    %v36 = vmul.f32 %v20, %v20
    %v37 = vmul.f32 %v21, %v21
    %v38 = vmul.f32 %v22, %v22
    %v39 = vmul.f32 %v23, %v23
    %v40 = vmul.f32 %v24, %v24
    %v41 = vmul.f32 %v25, %v25
    %v42 = vmul.f32 %v26, %v26
    %v43 = vmul.f32 %v27, %v27
    %v44 = vmul.f32 %v28, %v28
    %v45 = vmul.f32 %v29, %v29
    %v46 = vmul.f32 %v30, %v30
    %v47 = vmul.f32 %v31, %v31
    %v48 = vmul.f32 %v32, %v32
    %v49 = vmul.f32 %v33, %v33
    %v50 = vld [vmem:[%s1] sm:$0xff]
    %v51 = vld [vmem:[%s1 + $0x8] sm:$0xff]
    %v52 = vld [vmem:[%s1 + $0x10] sm:$0xff]
    %v53 = vld [vmem:[%s1 + $0x18] sm:$0xff]
    %v54 = vld [vmem:[%s1 + $0x20] sm:$0xff]
    %v55 = vld [vmem:[%s1 + $0x28] sm:$0xff]
    %v56 = vld [vmem:[%s1 + $0x30] sm:$0xff]
    %v57 = vld [vmem:[%s1 + $0x38] sm:$0xff]
    %v58 = vld [vmem:[%s1 + $0x40] sm:$0xff]
    %v59 = vld [vmem:[%s1 + $0x48] sm:$0xff]
    %v60 = vld [vmem:[%s1 + $0x50] sm:$0xff]
    %v61 = vld [vmem:[%s1 + $0x58] sm:$0xff]
    %v62 = vld [vmem:[%s1 + $0x60] sm:$0xff]
    %v63 = vld [vmem:[%s1 + $0x68] sm:$0xff]
    %v64 = vld [vmem:[%s1 + $0x70] sm:$0xff]
    %v65 = vld [vmem:[%s1 + $0x78] sm:$0xff]
    %v66 = vld [vmem:[%s1 + $0x80] sm:$0xff]
    %v67 = vld [vmem:[%s1 + $0x88] sm:$0xff]
    %v68 = vld [vmem:[%s1 + $0x90] sm:$0xff]
    %v69 = vld [vmem:[%s1 + $0x98] sm:$0xff]
    %v70 = vld [vmem:[%s1 + $0xa0] sm:$0xff]
    %v71 = vld [vmem:[%s1 + $0xa8] sm:$0xff]
    %v72 = vld [vmem:[%s1 + $0xb0] sm:$0xff]
    %v73 = vld [vmem:[%s1 + $0xb8] sm:$0xff]
    %v74 = vld [vmem:[%s1 + $0xc0] sm:$0xff]
    %v75 = vld [vmem:[%s1 + $0xc8] sm:$0xff]
    %v76 = vld [vmem:[%s1 + $0xd0] sm:$0xff]
    %v77 = vld [vmem:[%s1 + $0xd8] sm:$0xff]
    %v78 = vld [vmem:[%s1 + $0xe0] sm:$0xff]
    %v79 = vld [vmem:[%s1 + $0xe8] sm:$0xff]
    %vm80 = vcmask 916480
    %v82 = vsel %vm80, %v35, 0
    %v85 = vsel %vm80, %v37, 0
    %v88 = vsel %vm80, %v39, 0
    %v91 = vsel %vm80, %v41, 0
    %v94 = vsel %vm80, %v43, 0
    %v97 = vsel %vm80, %v45, 0
    %v100 = vsel %vm80, %v47, 0
    %v103 = vsel %vm80, %v49, 0
    %105 = vmatprep.subr.mxu0 0.0
    %106 = vmatpush1.msra.mxu0 %v50
    %107 = vmatprep.subr.mxu0 0.0
    %108 = vmatpush1.msra.mxu0 %v51
    %109 = vmatprep.subr.mxu0 0.0
    %110 = vmatpush1.msra.mxu0 %v52
    %111 = vmatprep.subr.mxu0 0.0
    %112 = vmatpush1.msra.mxu0 %v53
    %113 = vmatprep.subr.mxu0 0.0
    %114 = vmatpush1.msra.mxu0 %v54
    %115 = vmatprep.subr.mxu0 0.0
    %116 = vmatpush1.msra.mxu0 %v55
    %117 = vmatprep.subr.mxu0 0.0
    %118 = vmatpush1.msra.mxu0 %v56
    %119 = vmatprep.subr.mxu0 0.0
    %120 = vmatpush1.msra.mxu0 %v57
    %121 = vmatprep.subr.mxu0 0.0
    %122 = vmatpush1.msra.mxu0 %v58
    %123 = vmatprep.subr.mxu0 0.0
    %124 = vmatpush1.msra.mxu0 %v59
    %125 = vmatprep.subr.mxu0 0.0
    %126 = vmatpush1.msra.mxu0 %v60
    %127 = vmatprep.subr.mxu0 0.0
    %128 = vmatpush1.msra.mxu0 %v61
    %129 = vmatprep.subr.mxu0 0.0
    %130 = vmatpush1.msra.mxu0 %v62
    %131 = vmatprep.subr.mxu0 0.0
    %132 = vmatpush1.msra.mxu0 %v63
    %133 = vmatprep.subr.mxu0 0.0
    %134 = vmatpush1.msra.mxu0 %v64
    %135 = vmatprep.subr.mxu0 0.0
    %136 = vmatpush1.msra.mxu0 %v65
    %137 = vmatprep.subr.mxu0 0.0
    %138 = vmatpush1.msra.mxu0 %v66
    %139 = vmatprep.subr.mxu0 0.0
    %140 = vmatpush1.msra.mxu0 %v67
    %141 = vmatprep.subr.mxu0 0.0
    %142 = vmatpush1.msra.mxu0 %v68
    %143 = vmatprep.subr.mxu0 0.0
    %144 = vmatpush1.msra.mxu0 %v69
    %145 = vmatprep.subr.mxu0 0.0
    %146 = vmatpush1.msra.mxu0 %v70
    %147 = vmatprep.subr.mxu0 0.0
    %148 = vmatpush1.msra.mxu0 %v71
    %149 = vmatprep.subr.mxu0 0.0
    %150 = vmatpush1.msra.mxu0 %v72
    %151 = vmatprep.subr.mxu0 0.0
    %152 = vmatpush1.msra.mxu0 %v73
    %153 = vmatprep.subr.mxu0 0.0
    %154 = vmatpush1.msra.mxu0 %v74
    %155 = vmatprep.subr.mxu0 0.0
    %156 = vmatpush1.msra.mxu0 %v75
    %157 = vmatprep.subr.mxu0 0.0
    %158 = vmatpush1.msra.mxu0 %v76
    %159 = vmatprep.subr.mxu0 0.0
    %160 = vmatpush1.msra.mxu0 %v77
    %161 = vmatprep.subr.mxu0 0.0
    %162 = vmatpush1.msra.mxu0 %v78
    %163 = vmatprep.subr.mxu0 0.0
    %164 = vmatpush1.msra.mxu0 %v79
    %165 = vmatprep.subr.mxu0 0.0
    %166 = vmatpush1.msra.mxu0 0.0
    %167 = vmatprep.subr.mxu0 0.0
    %168 = vmatpush1.msra.mxu0 0.0
    %169 = vmatprep.mubr.f32.mxu0 %v82
    %170 = vmatmul.mubr.f32.gmra.mrb[0].mxu0 %v34
    %v171 = vpop.f32.mrb[0].mxu0
    %v172 = vadd.f32 1e-05, %v171
    %v173 = vpop.f32.mrb[0].mxu0
    %174 = vmatprep.mubr.f32.mxu0 %v85
    %175 = vmatmul.mubr.f32.gmra.mrb[0].mxu0 %v36
    %v176 = vpop.f32.mrb[0].mxu0
    %v177 = vadd.f32 1e-05, %v176
    %v178 = vpop.f32.mrb[0].mxu0
    %179 = vmatprep.mubr.f32.mxu0 %v88
    %180 = vmatmul.mubr.f32.gmra.mrb[0].mxu0 %v38
    %v181 = vpop.f32.mrb[0].mxu0
    %v182 = vadd.f32 1e-05, %v181
    %v183 = vpop.f32.mrb[0].mxu0
    %184 = vmatprep.mubr.f32.mxu0 %v91
    %185 = vmatmul.mubr.f32.gmra.mrb[0].mxu0 %v40
    %v186 = vpop.f32.mrb[0].mxu0
    %v187 = vadd.f32 1e-05, %v186
    %v188 = vpop.f32.mrb[0].mxu0
    %189 = vmatprep.mubr.f32.mxu0 %v94
    %190 = vmatmul.mubr.f32.gmra.mrb[0].mxu0 %v42
    %v191 = vpop.f32.mrb[0].mxu0
    %v192 = vadd.f32 1e-05, %v191
    %v193 = vpop.f32.mrb[0].mxu0
    %194 = vmatprep.mubr.f32.mxu0 %v97
    %195 = vmatmul.mubr.f32.gmra.mrb[0].mxu0 %v44
    %v196 = vpop.f32.mrb[0].mxu0
    %v197 = vadd.f32 1e-05, %v196
    %v198 = vpop.f32.mrb[0].mxu0
    %199 = vmatprep.mubr.f32.mxu0 %v100
    %200 = vmatmul.mubr.f32.gmra.mrb[0].mxu0 %v46
    %v201 = vpop.f32.mrb[0].mxu0
    %v202 = vadd.f32 1e-05, %v201
    %v203 = vpop.f32.mrb[0].mxu0
    %204 = vmatprep.mubr.f32.mxu0 %v103
    %205 = vmatmul.mubr.f32.gmra.mrb[0].mxu0 %v48
    %v206 = vpop.f32.mrb[0].mxu0
    %v207 = vadd.f32 1e-05, %v206
    %v208 = vpop.f32.mrb[0].mxu0
    %209 = vdwg.mxu0
    %v210 = vrsqrt.pop %v172
    %v211 = vrsqrt.pop %v177
    %v212 = vrsqrt.pop %v182
    %v213 = vrsqrt.pop %v187
    %v214 = vrsqrt.pop %v192
    %v215 = vrsqrt.pop %v197
    %v216 = vrsqrt.pop %v202
    %v217 = vrsqrt.pop %v207
    %v218 = vld [vmem:[%s2] sm:$0xff]
    %v219 = vld [vmem:[%s2 + $0x8] sm:$0xff]
    %v220 = vld [vmem:[%s2 + $0x10] sm:$0xff]
    %v221 = vld [vmem:[%s2 + $0x18] sm:$0xff]
    %v222 = vld [vmem:[%s2 + $0x20] sm:$0xff]
    %v223 = vld [vmem:[%s2 + $0x28] sm:$0xff]
    %v224 = vld [vmem:[%s2 + $0x30] sm:$0xff]
    %v225 = vld [vmem:[%s2 + $0x38] sm:$0xff]
    %v226 = vld [vmem:[%s2 + $0x40] sm:$0xff]
    %v227 = vld [vmem:[%s2 + $0x48] sm:$0xff]
    %v228 = vld [vmem:[%s2 + $0x50] sm:$0xff]
    %v229 = vld [vmem:[%s2 + $0x58] sm:$0xff]
    %v230 = vld [vmem:[%s2 + $0x60] sm:$0xff]
    %v231 = vld [vmem:[%s2 + $0x68] sm:$0xff]
    %v232 = vld [vmem:[%s2 + $0x70] sm:$0xff]
    %v233 = vld [vmem:[%s2 + $0x78] sm:$0xff]
    %v234 = vld [vmem:[%s2 + $0x80] sm:$0xff]
    %v235 = vld [vmem:[%s2 + $0x88] sm:$0xff]
    %v236 = vld [vmem:[%s2 + $0x90] sm:$0xff]
    %v237 = vld [vmem:[%s2 + $0x98] sm:$0xff]
    %v238 = vld [vmem:[%s2 + $0xa0] sm:$0xff]
    %v239 = vld [vmem:[%s2 + $0xa8] sm:$0xff]
    %v240 = vld [vmem:[%s2 + $0xb0] sm:$0xff]
    %v241 = vld [vmem:[%s2 + $0xb8] sm:$0xff]
    %v242 = vld [vmem:[%s2 + $0xc0] sm:$0xff]
    %v243 = vld [vmem:[%s2 + $0xc8] sm:$0xff]
    %v244 = vld [vmem:[%s2 + $0xd0] sm:$0xff]
    %v245 = vld [vmem:[%s2 + $0xd8] sm:$0xff]
    %v246 = vld [vmem:[%s2 + $0xe0] sm:$0xff]
    %v247 = vld [vmem:[%s2 + $0xe8] sm:$0xff]
    %v248 = vld [vmem:[%s2 + $0xf0] sm:$0xff]
    %v249 = vld [vmem:[%s2 + $0xf8] sm:$0xff]
    %250 = vmatprep.subr.mxu0 %v219
    %251 = vmatpush1.msra.mxu0 %v218
    %252 = vmatprep.subr.mxu0 %v221
    %253 = vmatpush1.msra.mxu0 %v220
    %254 = vmatprep.subr.mxu0 %v223
    %255 = vmatpush1.msra.mxu0 %v222
    %256 = vmatprep.subr.mxu0 %v225
    %257 = vmatpush1.msra.mxu0 %v224
    %258 = vmatprep.subr.mxu0 %v227
    %259 = vmatpush1.msra.mxu0 %v226
    %260 = vmatprep.subr.mxu0 %v229
    %261 = vmatpush1.msra.mxu0 %v228
    %262 = vmatprep.subr.mxu0 %v231
    %263 = vmatpush1.msra.mxu0 %v230
    %264 = vmatprep.subr.mxu0 %v233
    %265 = vmatpush1.msra.mxu0 %v232
    %266 = vmatprep.subr.mxu0 %v235
    %267 = vmatpush1.msra.mxu0 %v234
    %268 = vmatprep.subr.mxu0 %v237
    %269 = vmatpush1.msra.mxu0 %v236
    %270 = vmatprep.subr.mxu0 %v239
    %271 = vmatpush1.msra.mxu0 %v238
    %272 = vmatprep.subr.mxu0 %v241
    %273 = vmatpush1.msra.mxu0 %v240
    %274 = vmatprep.subr.mxu0 %v243
    %275 = vmatpush1.msra.mxu0 %v242
    %276 = vmatprep.subr.mxu0 %v245
    %277 = vmatpush1.msra.mxu0 %v244
    %278 = vmatprep.subr.mxu0 %v247
    %279 = vmatpush1.msra.mxu0 %v246
    %280 = vmatprep.subr.mxu0 %v249
    %281 = vmatpush1.msra.mxu0 %v248
    %282 = vmatprep.subr.mxu0 0.0
    %283 = vmatpush1.msra.mxu0 0.0
    %284 = vmatprep.subr.mxu0 0.0
    %285 = vmatpush1.msra.mxu0 0.0
    %286 = vmatprep.subr.mxu0 0.0
    %287 = vmatpush1.msra.mxu0 0.0
    %288 = vmatprep.subr.mxu0 0.0
    %289 = vmatpush1.msra.mxu0 0.0
    %290 = vmatprep.subr.mxu0 0.0
    %291 = vmatpush1.msra.mxu0 0.0
    %292 = vmatprep.subr.mxu0 0.0
    %293 = vmatpush1.msra.mxu0 0.0
    %294 = vmatprep.subr.mxu0 0.0
    %295 = vmatpush1.msra.mxu0 0.0
    %296 = vmatprep.subr.mxu0 0.0
    %297 = vmatpush1.msra.mxu0 0.0
    %298 = vmatprep.subr.mxu0 0.0
    %299 = vmatpush1.msra.mxu0 0.0
    %300 = vmatprep.subr.mxu0 0.0
    %301 = vmatpush1.msra.mxu0 0.0
    %302 = vmatprep.subr.mxu0 0.0
    %303 = vmatpush1.msra.mxu0 0.0
    %304 = vmatprep.subr.mxu0 0.0
    %305 = vmatpush1.msra.mxu0 0.0
    %306 = vmatprep.subr.mxu0 0.0
    %307 = vmatpush1.msra.mxu0 0.0
    %308 = vmatprep.subr.mxu0 0.0
    %309 = vmatpush1.msra.mxu0 0.0
    %310 = vmatprep.subr.mxu0 0.0
    %311 = vmatpush1.msra.mxu0 0.0
    %312 = vmatprep.subr.mxu0 0.0
    %313 = vmatpush1.msra.mxu0 0.0
    %314 = vmatprep.mubr.f32.mxu0 0.0
    %315 = vmatmul.mubr.f32.gmra.mrb[0].mxu0 %v210
    %v316 = vpop.f32.mrb[0].mxu0
    %v317 = vadd.f32 0.0, %v316
    %v318 = vpop.f32.mrb[0].mxu0
    %v319 = vadd.f32 0.0, %v318
    %320 = vmatprep.mubr.f32.mxu0 0.0
    %321 = vmatmul.mubr.f32.gmra.mrb[0].mxu0 %v211
    %v322 = vpop.f32.mrb[0].mxu0
    %v323 = vadd.f32 0.0, %v322
    %v324 = vpop.f32.mrb[0].mxu0
    %v325 = vadd.f32 0.0, %v324
    %326 = vmatprep.mubr.f32.mxu0 0.0
    %327 = vmatmul.mubr.f32.gmra.mrb[0].mxu0 %v212
    %v328 = vpop.f32.mrb[0].mxu0
    %v329 = vadd.f32 0.0, %v328
    %v330 = vpop.f32.mrb[0].mxu0
    %v331 = vadd.f32 0.0, %v330
    %332 = vmatprep.mubr.f32.mxu0 0.0
    %333 = vmatmul.mubr.f32.gmra.mrb[0].mxu0 %v213
    %v334 = vpop.f32.mrb[0].mxu0
    %v335 = vadd.f32 0.0, %v334
    %v336 = vpop.f32.mrb[0].mxu0
    %v337 = vadd.f32 0.0, %v336
    %338 = vmatprep.mubr.f32.mxu0 0.0
    %339 = vmatmul.mubr.f32.gmra.mrb[0].mxu0 %v214
    %v340 = vpop.f32.mrb[0].mxu0
    %v341 = vadd.f32 0.0, %v340
    %v342 = vpop.f32.mrb[0].mxu0
    %v343 = vadd.f32 0.0, %v342
    %344 = vmatprep.mubr.f32.mxu0 0.0
    %345 = vmatmul.mubr.f32.gmra.mrb[0].mxu0 %v215
    %v346 = vpop.f32.mrb[0].mxu0
    %v347 = vadd.f32 0.0, %v346
    %v348 = vpop.f32.mrb[0].mxu0
    %v349 = vadd.f32 0.0, %v348
    %350 = vmatprep.mubr.f32.mxu0 0.0
    %351 = vmatmul.mubr.f32.gmra.mrb[0].mxu0 %v216
    %v352 = vpop.f32.mrb[0].mxu0
    %v353 = vadd.f32 0.0, %v352
    %v354 = vpop.f32.mrb[0].mxu0
    %v355 = vadd.f32 0.0, %v354
    %356 = vmatprep.mubr.f32.mxu0 0.0
    %357 = vmatmul.mubr.f32.gmra.mrb[0].mxu0 %v217
    %v358 = vpop.f32.mrb[0].mxu0
    %v359 = vadd.f32 0.0, %v358
    %v360 = vpop.f32.mrb[0].mxu0
    %v361 = vadd.f32 0.0, %v360
    %362 = vdwg.mxu0
    %v363 = vmul.f32 %v18, %v317
    %v364 = vmul.f32 %v19, %v319
    %v365 = vmul.f32 %v20, %v323
    %v366 = vmul.f32 %v21, %v325
    %v367 = vmul.f32 %v22, %v329
    %v368 = vmul.f32 %v23, %v331
    %v369 = vmul.f32 %v24, %v335
    %v370 = vmul.f32 %v25, %v337
    %v371 = vmul.f32 %v26, %v341
    %v372 = vmul.f32 %v27, %v343
    %v373 = vmul.f32 %v28, %v347
    %v374 = vmul.f32 %v29, %v349
    %v375 = vmul.f32 %v30, %v353
    %v376 = vmul.f32 %v31, %v355
    %v377 = vmul.f32 %v32, %v359
    %v378 = vmul.f32 %v33, %v361
    %v379 = vld [vmem:[%s3] sm:$0x3]
    %v381 = vlaneseq
    %v382 = vshrl.u32 %v381, 7
    %v383 = vsub.s32 0, %v382
    %v384 = vrot.slane %v379, %v383
    %v385 = vlaneseq
    %v386 = vshrl.u32 %v385, 7
    %v387 = vsub.s32 1, %v386
    %v388 = vrot.slane %v379, %v387
    %v391 = vmul.f32 %v363, %v384
    %v392 = vmul.f32 %v364, %v388
    %v393 = vmul.f32 %v365, %v384
    %v394 = vmul.f32 %v366, %v388
    %v395 = vmul.f32 %v367, %v384
    %v396 = vmul.f32 %v368, %v388
    %v397 = vmul.f32 %v369, %v384
    %v398 = vmul.f32 %v370, %v388
    %v399 = vmul.f32 %v371, %v384
    %v400 = vmul.f32 %v372, %v388
    %v401 = vmul.f32 %v373, %v384
    %v402 = vmul.f32 %v374, %v388
    %v403 = vmul.f32 %v375, %v384
    %v404 = vmul.f32 %v376, %v388
    %v405 = vmul.f32 %v377, %v384
    %v406 = vmul.f32 %v378, %v388
    %407 = vst [vmem:[#allocation2] sm:$0xff] %v391
    %408 = vst.msk [vmem:[#allocation2 + $0x8] sm:$0xff] %vm80, %v392
    %409 = vst [vmem:[#allocation2 + $0x10] sm:$0xff] %v393
    %410 = vst.msk [vmem:[#allocation2 + $0x18] sm:$0xff] %vm80, %v394
    %411 = vst [vmem:[#allocation2 + $0x20] sm:$0xff] %v395
    %412 = vst.msk [vmem:[#allocation2 + $0x28] sm:$0xff] %vm80, %v396
    %413 = vst [vmem:[#allocation2 + $0x30] sm:$0xff] %v397
    %414 = vst.msk [vmem:[#allocation2 + $0x38] sm:$0xff] %vm80, %v398
    %415 = vst [vmem:[#allocation2 + $0x40] sm:$0xff] %v399
    %416 = vst.msk [vmem:[#allocation2 + $0x48] sm:$0xff] %vm80, %v400
    %417 = vst [vmem:[#allocation2 + $0x50] sm:$0xff] %v401
    %418 = vst.msk [vmem:[#allocation2 + $0x58] sm:$0xff] %vm80, %v402
    %419 = vst [vmem:[#allocation2 + $0x60] sm:$0xff] %v403
    %420 = vst.msk [vmem:[#allocation2 + $0x68] sm:$0xff] %vm80, %v404
    %421 = vst [vmem:[#allocation2 + $0x70] sm:$0xff] %v405
    %422 = vst.msk [vmem:[#allocation2 + $0x78] sm:$0xff] %vm80, %v406
    // Predicated region
    $region18: #{tpu_custom_call.1} parent=1 // pred_check
      _
    $region19: #{tpu_custom_call.1} parent=1 // pred_check_branch
      %424 = sbr.rel (0) target = $region21
    $region20: #{tpu_custom_call.1} parent=1 // pred_region
      %s426 = ssub.s32 2048, 2048
      %427 = vsyncadd [#allocation3], %s426
      %s428 = sshll.u32 [#allocation2], 4
      %s429 = int_to_ptr.vmem [resolvable:$true] %s428
      %434 = dma.vmem_to_hbm [thread:$0]  %s429, 2048, %s4, [#allocation3], 256, 256, 16
    $region21: #{tpu_custom_call.1} parent=1 // pred_fallthru
      _
    // Predicated region
    $region22: #{tpu_custom_call.1} parent=1 // pred_check
      _
    $region23: #{tpu_custom_call.1} parent=1 // pred_check_branch
      %436 = sbr.rel (0) target = $region25
    $region24: #{tpu_custom_call.1} parent=1 // pred_region
      %437 = dma.done [#allocation3], 2048
    $region25: #{tpu_custom_call.1} parent=1 // pred_fallthru
      _
    %438 = vsyncpa [#allocation3], 1

</llo_original>
